<compile_context>
chip_gen: v7x
topology: tpu7x:2x2x1
jax: 0.10.0
libtpu: 0.0.40
codegen_flags: <defaults>
</compile_context>

<pallas_src>
import functools

import jax
import jax.numpy as jnp
from jax.experimental import pallas as pl
from jax.experimental.pallas import tpu as pltpu


LEAKY_SLOPE = 0.01   # nn.LeakyReLU default
BN_EPS = 1e-5        # nn.BatchNorm1d default
LANE = 128


def _round_up(n, m):
    return ((n + m - 1) // m) * m


# ----------------------------------------------------------------------------
# Kernel: one batch tile of the fused MLP (6 matmuls + bias + LeakyReLU).
# ----------------------------------------------------------------------------
def _mlp_kernel(x_ref,
                w1, b1, w2, b2, w3, b3, w4, b4, w5, b5, w6, b6,
                out_ref):
    def leaky(z):                        # f32 VPU math
        return jnp.maximum(z, LEAKY_SLOPE * z)

    def hidden(h_bf16, w_ref, b_ref):
        z = jnp.dot(h_bf16, w_ref[...],
                    preferred_element_type=jnp.float32) + b_ref[...]
        return leaky(z).astype(jnp.bfloat16)

    # Layer 1 ("concat + Linear" already merged in the wrapper: x is the
    # concatenated bf16 feature tile, w1 is the full (22, 512) weight).
    h = hidden(x_ref[...], w1, b1)
    h = hidden(h, w2, b2)
    h = hidden(h, w3, b3)
    h = hidden(h, w4, b4)   # 64 -> padded 128 lanes (zero weights/bias)
    h = hidden(h, w5, b5)   # 32 -> padded 128 lanes

    # Final Linear (no BN / activation); output padded only to 8 columns.
    out = jnp.dot(h, w6[...], preferred_element_type=jnp.float32) + b6[...]
    out_ref[...] = out.astype(out_ref.dtype)


# ----------------------------------------------------------------------------
# pallas_call wrapper: batch grid, VMEM-resident weights, streamed activations.
# ----------------------------------------------------------------------------
def mlp_forward(combined_bf16, kernel_params, out_pad, batch_tile=1024):
    batch, feat = combined_bf16.shape

    batch8 = _round_up(batch, 8)
    tb = min(batch_tile, batch8)
    # v7x megacore: if the whole batch fits a single tile, split it in two so
    # the "parallel" grid axis has >= 2 steps (one per TensorCore).
    if tb == batch8 and batch8 >= 16:
        tb = _round_up(-(-batch8 // 2), 8)
    padded_batch = _round_up(batch, tb)

    pad = padded_batch - batch
    x = jnp.pad(combined_bf16, ((0, pad), (0, 0))) if pad else combined_bf16

    grid = (padded_batch // tb,)

    def resident_spec(p):
        # Full array + constant block index -> DMA'd once, stays in VMEM.
        return pl.BlockSpec(p.shape, lambda i: (0, 0))

    in_specs = [pl.BlockSpec((tb, feat), lambda i: (i, 0))]
    in_specs += [resident_spec(p) for p in kernel_params]

    out_padded = pl.pallas_call(
        _mlp_kernel,
        out_shape=jax.ShapeDtypeStruct((padded_batch, out_pad), jnp.float32),
        grid_spec=pltpu.PrefetchScalarGridSpec(
            num_scalar_prefetch=0,
            grid=grid,
            in_specs=in_specs,
            out_specs=pl.BlockSpec((tb, out_pad), lambda i: (i, 0)),
        ),
        compiler_params=pltpu.CompilerParams(
            dimension_semantics=("parallel",),       # megacore on v7x
            vmem_limit_bytes=48 * 1024 * 1024,       # safe on v7x's 64 MiB VMEM
        ),
    )(x, *kernel_params)
    return out_padded


# ----------------------------------------------------------------------------
# Parameter construction (deterministic, in-script). BN folded, lane-padded, bf16.
# ----------------------------------------------------------------------------
def make_params(key, numeric_input_dim, cat_input_dim,
                num_districts, district_emb_dim,
                num_properties, property_emb_dim,
                out_features=1):
    total_input_dim = (numeric_input_dim + cat_input_dim
                       + district_emb_dim + property_emb_dim)
    out_pad = _round_up(out_features, 8)
    dims_true = [total_input_dim, 512, 256, 128, 64, 32, out_features]
    dims_pad = [total_input_dim, 512, 256, 128, 128, 128, out_pad]

    keys = jax.random.split(key, 16)
    k_it = iter(keys)

    dist_table = jax.random.normal(next(k_it),
                                   (num_districts, district_emb_dim), jnp.float32)
    prop_table = jax.random.normal(next(k_it),
                                   (num_properties, property_emb_dim), jnp.float32)

    kernel_params = []
    for li in range(6):
        fi, fo = dims_true[li], dims_true[li + 1]
        fi_p, fo_p = dims_pad[li], dims_pad[li + 1]
        bound = 1.0 / float(fi) ** 0.5
        w = jax.random.uniform(next(k_it), (fi, fo), jnp.float32, -bound, bound)
        b = jax.random.uniform(next(k_it), (fo,), jnp.float32, -bound, bound)

        if li < 5:
            # Eval-mode BatchNorm1d fold: W' = W * s, b' = b * s + t
            gamma = jnp.ones((fo,), jnp.float32)
            beta = jnp.zeros((fo,), jnp.float32)
            running_mean = jnp.zeros((fo,), jnp.float32)
            running_var = jnp.ones((fo,), jnp.float32)
            scale = gamma / jnp.sqrt(running_var + BN_EPS)
            shift = beta - running_mean * scale
            w = w * scale[None, :]
            b = b * scale + shift

        # Zero-pad to padded dims (exact: padded lanes stay 0 through LeakyReLU).
        w = jnp.pad(w, ((0, fi_p - fi), (0, fo_p - fo)))
        b = jnp.pad(b, (0, fo_p - fo))[None, :]

        kernel_params.append(w.astype(jnp.bfloat16))   # bf16 weights
        kernel_params.append(b)                        # bias stays f32

    return dist_table, prop_table, kernel_params, out_pad


# ----------------------------------------------------------------------------
# Full forward: embedding lookup (tiny XLA gather) + fused concat + Pallas MLP.
# ----------------------------------------------------------------------------
@functools.partial(jax.jit,
                   static_argnames=("out_features", "out_pad", "batch_tile"))
def neural_network_forward(numeric_x, cat_x, district_ids, property_ids,
                           dist_table, prop_table, kernel_params,
                           out_features=1, out_pad=8, batch_tile=1024):
    # Gather + concat fuse in XLA; emit bf16 directly so the kernel streams
    # half the input bytes and does no per-tile casts.
    combined = jnp.concatenate(
        [numeric_x.astype(jnp.bfloat16),
         cat_x.astype(jnp.bfloat16),
         jnp.take(dist_table, district_ids, axis=0).astype(jnp.bfloat16),
         jnp.take(prop_table, property_ids, axis=0).astype(jnp.bfloat16)],
        axis=1)
    out_padded = mlp_forward(combined, kernel_params, out_pad,
                             batch_tile=batch_tile)
    batch = numeric_x.shape[0]
    return out_padded[:batch, :out_features]


if __name__ == "__main__":
    # Small, module-consistent shapes.
    batch = 8
    numeric_input_dim = 8
    cat_input_dim = 4
    num_districts = 10
    district_emb_dim = 6
    num_properties = 5
    property_emb_dim = 4
    out_features = 1

    root = jax.random.PRNGKey(0)
    k_param, k_num, k_cat, k_d, k_p = jax.random.split(root, 5)

    dist_table, prop_table, kernel_params, out_pad = make_params(
        k_param, numeric_input_dim, cat_input_dim,
        num_districts, district_emb_dim,
        num_properties, property_emb_dim, out_features)

    numeric_x = jax.random.normal(k_num, (batch, numeric_input_dim), jnp.float32)
    cat_x = jax.random.normal(k_cat, (batch, cat_input_dim), jnp.float32)
    district_ids = jax.random.randint(k_d, (batch,), 0, num_districts)
    property_ids = jax.random.randint(k_p, (batch,), 0, num_properties)

    out = neural_network_forward(numeric_x, cat_x, district_ids, property_ids,
                                 dist_table, prop_table, kernel_params,
                                 out_features=out_features, out_pad=out_pad)
    out = jax.block_until_ready(out)
    assert out.shape == (batch, out_features), out.shape
    assert bool(jnp.all(jnp.isfinite(out)))
    print("KERNEL_OK")
</pallas_src>

<mosaic_0001>
module attributes {stable_mosaic.version = 11 : i64} {
  func.func @_mlp_kernel(%arg0: i32, %arg1: memref<8x22xbf16, #tpu.memory_space<vmem>>, %arg2: memref<22x512xbf16, #tpu.memory_space<vmem>>, %arg3: memref<1x512xf32, #tpu.memory_space<vmem>>, %arg4: memref<512x256xbf16, #tpu.memory_space<vmem>>, %arg5: memref<1x256xf32, #tpu.memory_space<vmem>>, %arg6: memref<256x128xbf16, #tpu.memory_space<vmem>>, %arg7: memref<1x128xf32, #tpu.memory_space<vmem>>, %arg8: memref<128x128xbf16, #tpu.memory_space<vmem>>, %arg9: memref<1x128xf32, #tpu.memory_space<vmem>>, %arg10: memref<128x128xbf16, #tpu.memory_space<vmem>>, %arg11: memref<1x128xf32, #tpu.memory_space<vmem>>, %arg12: memref<128x8xbf16, #tpu.memory_space<vmem>>, %arg13: memref<1x8xf32, #tpu.memory_space<vmem>>, %arg14: memref<8x8xf32, #tpu.memory_space<vmem>>) attributes {dimension_semantics = [#tpu.dimension_semantics<parallel>], iteration_bounds = array<i64: 1>, scalar_prefetch = 0 : i64, scratch_operands = 0 : i64, tpu.core_type = #tpu.core_type<tc>, window_params = [{transform_indices = @transform_0, window_bounds = array<i64: 8, 22>}, {pipeline_mode = #tpu.pipeline_mode<synchronous>, transform_indices = @transform_1, window_bounds = array<i64: 22, 512>}, {pipeline_mode = #tpu.pipeline_mode<synchronous>, transform_indices = @transform_2, window_bounds = array<i64: 1, 512>}, {pipeline_mode = #tpu.pipeline_mode<synchronous>, transform_indices = @transform_3, window_bounds = array<i64: 512, 256>}, {pipeline_mode = #tpu.pipeline_mode<synchronous>, transform_indices = @transform_4, window_bounds = array<i64: 1, 256>}, {pipeline_mode = #tpu.pipeline_mode<synchronous>, transform_indices = @transform_5, window_bounds = array<i64: 256, 128>}, {pipeline_mode = #tpu.pipeline_mode<synchronous>, transform_indices = @transform_6, window_bounds = array<i64: 1, 128>}, {pipeline_mode = #tpu.pipeline_mode<synchronous>, transform_indices = @transform_7, window_bounds = array<i64: 128, 128>}, {pipeline_mode = #tpu.pipeline_mode<synchronous>, transform_indices = @transform_8, window_bounds = array<i64: 1, 128>}, {pipeline_mode = #tpu.pipeline_mode<synchronous>, transform_indices = @transform_9, window_bounds = array<i64: 128, 128>}, {pipeline_mode = #tpu.pipeline_mode<synchronous>, transform_indices = @transform_10, window_bounds = array<i64: 1, 128>}, {pipeline_mode = #tpu.pipeline_mode<synchronous>, transform_indices = @transform_11, window_bounds = array<i64: 128, 8>}, {pipeline_mode = #tpu.pipeline_mode<synchronous>, transform_indices = @transform_12, window_bounds = array<i64: 1, 8>}, {transform_indices = @transform_13, window_bounds = array<i64: 8, 8>}]} {
    %c0 = arith.constant 0 : index
    %c0_0 = arith.constant 0 : index
    %0 = vector.load %arg1[%c0, %c0_0] : memref<8x22xbf16, #tpu.memory_space<vmem>>, vector<8x22xbf16>
    %c0_1 = arith.constant 0 : index
    %c0_2 = arith.constant 0 : index
    %1 = vector.load %arg2[%c0_1, %c0_2] : memref<22x512xbf16, #tpu.memory_space<vmem>>, vector<22x512xbf16>
    %cst = arith.constant dense<0.000000e+00> : vector<8x512xf32>
    %2 = tpu.matmul %0, %1, %cst {dimension_numbers = #tpu.dot_dimension_numbers<[1], [0], [0], [1], [0, 0, 1, 1], [], []>} : vector<8x22xbf16>, vector<22x512xbf16>, vector<8x512xf32> -> vector<8x512xf32>
    %c0_3 = arith.constant 0 : index
    %c0_4 = arith.constant 0 : index
    %3 = vector.load %arg3[%c0_3, %c0_4] : memref<1x512xf32, #tpu.memory_space<vmem>>, vector<1x512xf32>
    %4 = vector.broadcast %3 : vector<1x512xf32> to vector<8x512xf32>
    %5 = arith.addf %2, %4 : vector<8x512xf32>
    %cst_5 = arith.constant 0.00999999977 : f32
    %6 = vector.broadcast %cst_5 : f32 to vector<8x512xf32>
    %7 = arith.mulf %6, %5 : vector<8x512xf32>
    %8 = arith.maximumf %5, %7 : vector<8x512xf32>
    %9 = arith.truncf %8 : vector<8x512xf32> to vector<8x512xbf16>
    %c0_6 = arith.constant 0 : index
    %c0_7 = arith.constant 0 : index
    %10 = vector.load %arg4[%c0_6, %c0_7] : memref<512x256xbf16, #tpu.memory_space<vmem>>, vector<512x256xbf16>
    %cst_8 = arith.constant dense<0.000000e+00> : vector<8x256xf32>
    %11 = tpu.matmul %9, %10, %cst_8 {dimension_numbers = #tpu.dot_dimension_numbers<[1], [0], [0], [1], [0, 0, 1, 1], [], []>} : vector<8x512xbf16>, vector<512x256xbf16>, vector<8x256xf32> -> vector<8x256xf32>
    %c0_9 = arith.constant 0 : index
    %c0_10 = arith.constant 0 : index
    %12 = vector.load %arg5[%c0_9, %c0_10] : memref<1x256xf32, #tpu.memory_space<vmem>>, vector<1x256xf32>
    %13 = vector.broadcast %12 : vector<1x256xf32> to vector<8x256xf32>
    %14 = arith.addf %11, %13 : vector<8x256xf32>
    %cst_11 = arith.constant 0.00999999977 : f32
    %15 = vector.broadcast %cst_11 : f32 to vector<8x256xf32>
    %16 = arith.mulf %15, %14 : vector<8x256xf32>
    %17 = arith.maximumf %14, %16 : vector<8x256xf32>
    %18 = arith.truncf %17 : vector<8x256xf32> to vector<8x256xbf16>
    %c0_12 = arith.constant 0 : index
    %c0_13 = arith.constant 0 : index
    %19 = vector.load %arg6[%c0_12, %c0_13] : memref<256x128xbf16, #tpu.memory_space<vmem>>, vector<256x128xbf16>
    %cst_14 = arith.constant dense<0.000000e+00> : vector<8x128xf32>
    %20 = tpu.matmul %18, %19, %cst_14 {dimension_numbers = #tpu.dot_dimension_numbers<[1], [0], [0], [1], [0, 0, 1, 1], [], []>} : vector<8x256xbf16>, vector<256x128xbf16>, vector<8x128xf32> -> vector<8x128xf32>
    %c0_15 = arith.constant 0 : index
    %c0_16 = arith.constant 0 : index
    %21 = vector.load %arg7[%c0_15, %c0_16] : memref<1x128xf32, #tpu.memory_space<vmem>>, vector<1x128xf32>
    %22 = vector.broadcast %21 : vector<1x128xf32> to vector<8x128xf32>
    %23 = arith.addf %20, %22 : vector<8x128xf32>
    %cst_17 = arith.constant 0.00999999977 : f32
    %24 = vector.broadcast %cst_17 : f32 to vector<8x128xf32>
    %25 = arith.mulf %24, %23 : vector<8x128xf32>
    %26 = arith.maximumf %23, %25 : vector<8x128xf32>
    %27 = arith.truncf %26 : vector<8x128xf32> to vector<8x128xbf16>
    %c0_18 = arith.constant 0 : index
    %c0_19 = arith.constant 0 : index
    %28 = vector.load %arg8[%c0_18, %c0_19] : memref<128x128xbf16, #tpu.memory_space<vmem>>, vector<128x128xbf16>
    %cst_20 = arith.constant dense<0.000000e+00> : vector<8x128xf32>
    %29 = tpu.matmul %27, %28, %cst_20 {dimension_numbers = #tpu.dot_dimension_numbers<[1], [0], [0], [1], [0, 0, 1, 1], [], []>} : vector<8x128xbf16>, vector<128x128xbf16>, vector<8x128xf32> -> vector<8x128xf32>
    %c0_21 = arith.constant 0 : index
    %c0_22 = arith.constant 0 : index
    %30 = vector.load %arg9[%c0_21, %c0_22] : memref<1x128xf32, #tpu.memory_space<vmem>>, vector<1x128xf32>
    %31 = vector.broadcast %30 : vector<1x128xf32> to vector<8x128xf32>
    %32 = arith.addf %29, %31 : vector<8x128xf32>
    %cst_23 = arith.constant 0.00999999977 : f32
    %33 = vector.broadcast %cst_23 : f32 to vector<8x128xf32>
    %34 = arith.mulf %33, %32 : vector<8x128xf32>
    %35 = arith.maximumf %32, %34 : vector<8x128xf32>
    %36 = arith.truncf %35 : vector<8x128xf32> to vector<8x128xbf16>
    %c0_24 = arith.constant 0 : index
    %c0_25 = arith.constant 0 : index
    %37 = vector.load %arg10[%c0_24, %c0_25] : memref<128x128xbf16, #tpu.memory_space<vmem>>, vector<128x128xbf16>
    %cst_26 = arith.constant dense<0.000000e+00> : vector<8x128xf32>
    %38 = tpu.matmul %36, %37, %cst_26 {dimension_numbers = #tpu.dot_dimension_numbers<[1], [0], [0], [1], [0, 0, 1, 1], [], []>} : vector<8x128xbf16>, vector<128x128xbf16>, vector<8x128xf32> -> vector<8x128xf32>
    %c0_27 = arith.constant 0 : index
    %c0_28 = arith.constant 0 : index
    %39 = vector.load %arg11[%c0_27, %c0_28] : memref<1x128xf32, #tpu.memory_space<vmem>>, vector<1x128xf32>
    %40 = vector.broadcast %39 : vector<1x128xf32> to vector<8x128xf32>
    %41 = arith.addf %38, %40 : vector<8x128xf32>
    %cst_29 = arith.constant 0.00999999977 : f32
    %42 = vector.broadcast %cst_29 : f32 to vector<8x128xf32>
    %43 = arith.mulf %42, %41 : vector<8x128xf32>
    %44 = arith.maximumf %41, %43 : vector<8x128xf32>
    %45 = arith.truncf %44 : vector<8x128xf32> to vector<8x128xbf16>
    %c0_30 = arith.constant 0 : index
    %c0_31 = arith.constant 0 : index
    %46 = vector.load %arg12[%c0_30, %c0_31] : memref<128x8xbf16, #tpu.memory_space<vmem>>, vector<128x8xbf16>
    %cst_32 = arith.constant dense<0.000000e+00> : vector<8x8xf32>
    %47 = tpu.matmul %45, %46, %cst_32 {dimension_numbers = #tpu.dot_dimension_numbers<[1], [0], [0], [1], [0, 0, 1, 1], [], []>} : vector<8x128xbf16>, vector<128x8xbf16>, vector<8x8xf32> -> vector<8x8xf32>
    %c0_33 = arith.constant 0 : index
    %c0_34 = arith.constant 0 : index
    %48 = vector.load %arg13[%c0_33, %c0_34] : memref<1x8xf32, #tpu.memory_space<vmem>>, vector<1x8xf32>
    %49 = vector.broadcast %48 : vector<1x8xf32> to vector<8x8xf32>
    %50 = arith.addf %47, %49 : vector<8x8xf32>
    %c0_35 = arith.constant 0 : index
    %c0_36 = arith.constant 0 : index
    %51 = vector.load %arg14[%c0_35, %c0_36] : memref<8x8xf32, #tpu.memory_space<vmem>>, vector<8x8xf32>
    tpu.vector_store %arg14[%c0_35, %c0_36], %50 {strides = array<i32>} : memref<8x8xf32, #tpu.memory_space<vmem>>, vector<8x8xf32>,
    return
  }
  func.func @transform_0(%arg0: i32) -> (i32, i32) {
    %c0_i32 = arith.constant 0 : i32
    %c0_i32_0 = arith.constant 0 : i32
    return %arg0, %c0_i32 : i32, i32
  }
  func.func @transform_1(%arg0: i32) -> (i32, i32) {
    %c0_i32 = arith.constant 0 : i32
    %c0_i32_0 = arith.constant 0 : i32
    %c0_i32_1 = arith.constant 0 : i32
    return %c0_i32, %c0_i32_0 : i32, i32
  }
  func.func @transform_2(%arg0: i32) -> (i32, i32) {
    %c0_i32 = arith.constant 0 : i32
    %c0_i32_0 = arith.constant 0 : i32
    %c0_i32_1 = arith.constant 0 : i32
    return %c0_i32, %c0_i32_0 : i32, i32
  }
  func.func @transform_3(%arg0: i32) -> (i32, i32) {
    %c0_i32 = arith.constant 0 : i32
    %c0_i32_0 = arith.constant 0 : i32
    %c0_i32_1 = arith.constant 0 : i32
    return %c0_i32, %c0_i32_0 : i32, i32
  }
  func.func @transform_4(%arg0: i32) -> (i32, i32) {
    %c0_i32 = arith.constant 0 : i32
    %c0_i32_0 = arith.constant 0 : i32
    %c0_i32_1 = arith.constant 0 : i32
    return %c0_i32, %c0_i32_0 : i32, i32
  }
  func.func @transform_5(%arg0: i32) -> (i32, i32) {
    %c0_i32 = arith.constant 0 : i32
    %c0_i32_0 = arith.constant 0 : i32
    %c0_i32_1 = arith.constant 0 : i32
    return %c0_i32, %c0_i32_0 : i32, i32
  }
  func.func @transform_6(%arg0: i32) -> (i32, i32) {
    %c0_i32 = arith.constant 0 : i32
    %c0_i32_0 = arith.constant 0 : i32
    %c0_i32_1 = arith.constant 0 : i32
    return %c0_i32, %c0_i32_0 : i32, i32
  }
  func.func @transform_7(%arg0: i32) -> (i32, i32) {
    %c0_i32 = arith.constant 0 : i32
    %c0_i32_0 = arith.constant 0 : i32
    %c0_i32_1 = arith.constant 0 : i32
    return %c0_i32, %c0_i32_0 : i32, i32
  }
  func.func @transform_8(%arg0: i32) -> (i32, i32) {
    %c0_i32 = arith.constant 0 : i32
    %c0_i32_0 = arith.constant 0 : i32
    %c0_i32_1 = arith.constant 0 : i32
    return %c0_i32, %c0_i32_0 : i32, i32
  }
  func.func @transform_9(%arg0: i32) -> (i32, i32) {
    %c0_i32 = arith.constant 0 : i32
    %c0_i32_0 = arith.constant 0 : i32
    %c0_i32_1 = arith.constant 0 : i32
    return %c0_i32, %c0_i32_0 : i32, i32
  }
  func.func @transform_10(%arg0: i32) -> (i32, i32) {
    %c0_i32 = arith.constant 0 : i32
    %c0_i32_0 = arith.constant 0 : i32
    %c0_i32_1 = arith.constant 0 : i32
    return %c0_i32, %c0_i32_0 : i32, i32
  }
  func.func @transform_11(%arg0: i32) -> (i32, i32) {
    %c0_i32 = arith.constant 0 : i32
    %c0_i32_0 = arith.constant 0 : i32
    %c0_i32_1 = arith.constant 0 : i32
    return %c0_i32, %c0_i32_0 : i32, i32
  }
  func.func @transform_12(%arg0: i32) -> (i32, i32) {
    %c0_i32 = arith.constant 0 : i32
    %c0_i32_0 = arith.constant 0 : i32
    %c0_i32_1 = arith.constant 0 : i32
    return %c0_i32, %c0_i32_0 : i32, i32
  }
  func.func @transform_13(%arg0: i32) -> (i32, i32) {
    %c0_i32 = arith.constant 0 : i32
    %c0_i32_0 = arith.constant 0 : i32
    return %arg0, %c0_i32 : i32, i32
  }
}

</mosaic_0001>

<llo_original>
// kernel: neural_network_forward.1
$region0: #{neural_network_forward.1}
  #allocation0 [shape = 'u32[]', space=smem, size = 0x4, offset = 0x4, fixed_abs, tag = 'smem constant byte address 0x4 - core index']
  #allocation1 [shape = 'u32[144,128]{1,0:T(1,128)}', space=vmem, size = 0x12000, scoped, tag = 'internal scratch']
  %s0 = inlined_call_operand.vmem [shape: bf16[8,22], index: 0, kind: input, shape index: {}]
  %s1 = inlined_call_operand.hbm [shape: bf16[22,512], index: 1, kind: input, shape index: {}]
  %s2 = inlined_call_operand.vmem [shape: f32[1,512], index: 2, kind: input, shape index: {}]
  %s3 = inlined_call_operand.hbm [shape: bf16[512,256], index: 3, kind: input, shape index: {}]
  %s4 = inlined_call_operand.vmem [shape: f32[1,256], index: 4, kind: input, shape index: {}]
  %s5 = inlined_call_operand.vmem [shape: bf16[256,128], index: 5, kind: input, shape index: {}]
  %s6 = inlined_call_operand.vmem [shape: f32[1,128], index: 6, kind: input, shape index: {}]
  %s7 = inlined_call_operand.vmem [shape: bf16[128,128], index: 7, kind: input, shape index: {}]
  %s8 = inlined_call_operand.vmem [shape: f32[1,128], index: 8, kind: input, shape index: {}]
  %s9 = inlined_call_operand.vmem [shape: bf16[128,128], index: 9, kind: input, shape index: {}]
  %s10 = inlined_call_operand.vmem [shape: f32[1,128], index: 10, kind: input, shape index: {}]
  %s11 = inlined_call_operand.vmem [shape: bf16[128,8], index: 11, kind: input, shape index: {}]
  %s12 = inlined_call_operand.vmem [shape: f32[1,8], index: 12, kind: input, shape index: {}]
  %s13 = inlined_call_operand.vmem [shape: f32[8,8], index: 13, kind: output, shape index: {}]
  %s14 = sld [smem:[#allocation0]]
  $region70: #{neural_network_forward.1} parent=0
    _
  %s16 = ssub.s32 1, %s14
  %s17 = scalar_select 0, %s16, %s14
  $region1: #{neural_network_forward.1} parent=0
    #allocation2 [shape = 'u8[24576]{0}', space=vmem, size = 0x6000, scoped, tag = 'input window, operand 1, single buffered']
    #allocation3 [shape = 's32[1]{0}', space=sflag, size = 0x4, scoped, tag = 'scoped memory for neural_network_forward.1']
    #allocation4 [shape = 'u8[262144]{0}', space=vmem, size = 0x40000, scoped, tag = 'input window, operand 3, single buffered']
    #allocation5 [shape = 's32[1]{0}', space=sflag, size = 0x4, scoped, tag = 'scoped memory for neural_network_forward.1']
    %18 = vsyncpa [#allocation3], 0
    %19 = vsyncpa [#allocation5], 0
    // Predicated region
    $region2: #{neural_network_forward.1} parent=1 // pred_check
      _
    $region3: #{neural_network_forward.1} parent=1 // pred_check_branch
      %21 = sbr.rel (0) target = $region5
    $region4: #{neural_network_forward.1} parent=1 // pred_region
      _
    $region5: #{neural_network_forward.1} parent=1 // pred_fallthru
      _
    // Predicated region
    $region6: #{neural_network_forward.1} parent=1 // pred_check
      _
    $region7: #{neural_network_forward.1} parent=1 // pred_check_branch
      %23 = sbr.rel (0) target = $region9
    $region8: #{neural_network_forward.1} parent=1 // pred_region
      %s25 = ssub.s32 768, 768
      %26 = vsyncadd [#allocation3], %s25
      %s27 = sshll.u32 [#allocation2], 4
      %s28 = int_to_ptr.vmem [resolvable:$true] %s27
      %33 = dma.hbm_to_vmem [thread:$0]  %s1, 768, %s28, [#allocation3], 256, 256, 16
    $region9: #{neural_network_forward.1} parent=1 // pred_fallthru
      _
    // Predicated region
    $region10: #{neural_network_forward.1} parent=1 // pred_check
      _
    $region11: #{neural_network_forward.1} parent=1 // pred_check_branch
      %35 = sbr.rel (0) target = $region13
    $region12: #{neural_network_forward.1} parent=1 // pred_region
      _
    $region13: #{neural_network_forward.1} parent=1 // pred_fallthru
      _
    // Predicated region
    $region14: #{neural_network_forward.1} parent=1 // pred_check
      _
    $region15: #{neural_network_forward.1} parent=1 // pred_check_branch
      %37 = sbr.rel (0) target = $region17
    $region16: #{neural_network_forward.1} parent=1 // pred_region
      %s39 = ssub.s32 8192, 8192
      %40 = vsyncadd [#allocation5], %s39
      %s41 = sshll.u32 [#allocation4], 4
      %s42 = int_to_ptr.vmem [resolvable:$true] %s41
      %47 = dma.hbm_to_vmem [thread:$0]  %s3, 8192, %s42, [#allocation5], 128, 128, 8
    $region17: #{neural_network_forward.1} parent=1 // pred_fallthru
      _
    // Predicated region
    $region18: #{neural_network_forward.1} parent=1 // pred_check
      _
    $region19: #{neural_network_forward.1} parent=1 // pred_check_branch
      %49 = sbr.rel (0) target = $region21
    $region20: #{neural_network_forward.1} parent=1 // pred_region
      _
    $region21: #{neural_network_forward.1} parent=1 // pred_fallthru
      _
    // Predicated region
    $region22: #{neural_network_forward.1} parent=1 // pred_check
      _
    $region23: #{neural_network_forward.1} parent=1 // pred_check_branch
      %51 = sbr.rel (0) target = $region25
    $region24: #{neural_network_forward.1} parent=1 // pred_region
      _
    $region25: #{neural_network_forward.1} parent=1 // pred_fallthru
      _
    // Predicated region
    $region26: #{neural_network_forward.1} parent=1 // pred_check
      _
    $region27: #{neural_network_forward.1} parent=1 // pred_check_branch
      %53 = sbr.rel (0) target = $region29
    $region28: #{neural_network_forward.1} parent=1 // pred_region
      _
    $region29: #{neural_network_forward.1} parent=1 // pred_fallthru
      _
    // Predicated region
    $region30: #{neural_network_forward.1} parent=1 // pred_check
      _
    $region31: #{neural_network_forward.1} parent=1 // pred_check_branch
      %55 = sbr.rel (0) target = $region33
    $region32: #{neural_network_forward.1} parent=1 // pred_region
      _
    $region33: #{neural_network_forward.1} parent=1 // pred_fallthru
      _
    // Predicated region
    $region34: #{neural_network_forward.1} parent=1 // pred_check
      _
    $region35: #{neural_network_forward.1} parent=1 // pred_check_branch
      %57 = sbr.rel (0) target = $region37
    $region36: #{neural_network_forward.1} parent=1 // pred_region
      _
    $region37: #{neural_network_forward.1} parent=1 // pred_fallthru
      _
    // Predicated region
    $region38: #{neural_network_forward.1} parent=1 // pred_check
      _
    $region39: #{neural_network_forward.1} parent=1 // pred_check_branch
      %59 = sbr.rel (0) target = $region41
    $region40: #{neural_network_forward.1} parent=1 // pred_region
      _
    $region41: #{neural_network_forward.1} parent=1 // pred_fallthru
      _
    // Predicated region
    $region42: #{neural_network_forward.1} parent=1 // pred_check
      _
    $region43: #{neural_network_forward.1} parent=1 // pred_check_branch
      %61 = sbr.rel (0) target = $region45
    $region44: #{neural_network_forward.1} parent=1 // pred_region
      _
    $region45: #{neural_network_forward.1} parent=1 // pred_fallthru
      _
    // Predicated region
    $region46: #{neural_network_forward.1} parent=1 // pred_check
      _
    $region47: #{neural_network_forward.1} parent=1 // pred_check_branch
      %63 = sbr.rel (0) target = $region49
    $region48: #{neural_network_forward.1} parent=1 // pred_region
      _
    $region49: #{neural_network_forward.1} parent=1 // pred_fallthru
      _
    // Predicated region
    $region50: #{neural_network_forward.1} parent=1 // pred_check
      _
    $region51: #{neural_network_forward.1} parent=1 // pred_check_branch
      %65 = sbr.rel (0) target = $region53
    $region52: #{neural_network_forward.1} parent=1 // pred_region
      _
    $region53: #{neural_network_forward.1} parent=1 // pred_fallthru
      _
    // Predicated region
    $region54: #{neural_network_forward.1} parent=1 // pred_check
      _
    $region55: #{neural_network_forward.1} parent=1 // pred_check_branch
      %67 = sbr.rel (0) target = $region57
    $region56: #{neural_network_forward.1} parent=1 // pred_region
      %68 = dma.done [#allocation3], 768
    $region57: #{neural_network_forward.1} parent=1 // pred_fallthru
      _
    // Predicated region
    $region58: #{neural_network_forward.1} parent=1 // pred_check
      _
    $region59: #{neural_network_forward.1} parent=1 // pred_check_branch
      %70 = sbr.rel (0) target = $region61
    $region60: #{neural_network_forward.1} parent=1 // pred_region
      %71 = dma.done [#allocation5], 8192
    $region61: #{neural_network_forward.1} parent=1 // pred_fallthru
      _
    %v73 = vld [vmem:[%s0] sm:$0xf]
    %v74 = vld [vmem:[#allocation2] sm:$0xff]
    %v75 = vld [vmem:[#allocation2 + $0x8] sm:$0xff]
    %v76 = vld [vmem:[#allocation2 + $0x10] sm:$0xff]
    %v77 = vld [vmem:[#allocation2 + $0x18] sm:$0xff]
    %v78 = vld [vmem:[#allocation2 + $0x20] sm:$0x77]
    %v79 = vld [vmem:[#allocation2 + $0x28] sm:$0x77]
    %v80 = vld [vmem:[%s2] sm:$0xf]
    %v82 = vlaneseq
    %v83 = vshrl.u32 %v82, 7
    %v84 = vsub.s32 0, %v83
    %v85 = vrot.slane %v80, %v84
    %v86 = vlaneseq
    %v87 = vshrl.u32 %v86, 7
    %v88 = vsub.s32 1, %v87
    %v89 = vrot.slane %v80, %v88
    %v90 = vlaneseq
    %v91 = vshrl.u32 %v90, 7
    %v92 = vsub.s32 2, %v91
    %v93 = vrot.slane %v80, %v92
    %v94 = vlaneseq
    %v95 = vshrl.u32 %v94, 7
    %v96 = vsub.s32 3, %v95
    %v97 = vrot.slane %v80, %v96
    %v108 = vunpack.c.l.b16 %v74
    %v109 = vunpack.c.h.b16 %v74
    %v110 = vunpack.c.l.b16 %v75
    %v111 = vunpack.c.h.b16 %v75
    %v112 = vunpack.c.l.b16 %v76
    %v113 = vunpack.c.h.b16 %v76
    %v114 = vunpack.c.l.b16 %v77
    %v115 = vunpack.c.h.b16 %v77
    %v116 = vunpack.c.l.b16 %v78
    %v117 = vunpack.c.h.b16 %v78
    %v118 = vunpack.c.l.b16 %v79
    %v119 = vunpack.c.h.b16 %v79
    %v120 = vpack.c.b16 %v112, %v108
    %v121 = vpack.c.b16 %v113, %v109
    %v122 = vpack.c.b16 %v114, %v110
    %v123 = vpack.c.b16 %v115, %v111
    %v124 = vpack.c.b16 %v116, %v116
    %v125 = vpack.c.b16 %v117, %v117
    %v126 = vpack.c.b16 %v118, %v118
    %v127 = vpack.c.b16 %v119, %v119
    %vm132 = vcmask 179200
    %v134 = vsel %vm132, %v73, 0
    %vm136 = vcmask 1042432
    %v138 = vsel %vm136, %v124, 0
    %v141 = vsel %vm136, %v125, 0
    %v144 = vsel %vm136, %v126, 0
    %v147 = vsel %vm136, %v127, 0
    %149 = vmatprep.subr.bf16.mxu0 %v121
    %150 = vmatpush1.bf16.msra.mxu0 %v120
    %151 = vmatprep.subr.bf16.mxu0 %v141
    %152 = vmatpush1.bf16.msra.mxu0 %v138
    %153 = vmatprep.subr.bf16.mxu0 0
    %154 = vmatpush1.bf16.msra.mxu0 0
    %155 = vmatprep.subr.bf16.mxu0 0
    %156 = vmatpush1.bf16.msra.mxu0 0
    %157 = vmatprep.subr.bf16.mxu0 0
    %158 = vmatpush1.bf16.msra.mxu0 0
    %159 = vmatprep.subr.bf16.mxu0 0
    %160 = vmatpush1.bf16.msra.mxu0 0
    %161 = vmatprep.subr.bf16.mxu0 0
    %162 = vmatpush1.bf16.msra.mxu0 0
    %163 = vmatprep.subr.bf16.mxu0 0
    %164 = vmatpush1.bf16.msra.mxu0 0
    %165 = vmatprep.subr.bf16.mxu0 0
    %166 = vmatpush1.bf16.msra.mxu0 0
    %167 = vmatprep.subr.bf16.mxu0 0
    %168 = vmatpush1.bf16.msra.mxu0 0
    %169 = vmatprep.subr.bf16.mxu0 0
    %170 = vmatpush1.bf16.msra.mxu0 0
    %171 = vmatprep.subr.bf16.mxu0 0
    %172 = vmatpush1.bf16.msra.mxu0 0
    %173 = vmatprep.subr.bf16.mxu0 0
    %174 = vmatpush1.bf16.msra.mxu0 0
    %175 = vmatprep.subr.bf16.mxu0 0
    %176 = vmatpush1.bf16.msra.mxu0 0
    %177 = vmatprep.subr.bf16.mxu0 0
    %178 = vmatpush1.bf16.msra.mxu0 0
    %179 = vmatprep.subr.bf16.mxu0 0
    %180 = vmatpush1.bf16.msra.mxu0 0
    %181 = vmatprep.mubr.bf16.mxu0 0
    %182 = vmatmul.mubr.bf16.gmra.mrb[0].mxu0 %v134
    %v183 = vpop.f32.mrb[0].mxu0
    %v184 = vadd.f32 %v85, %v183
    %v185 = vpop.f32.mrb[0].mxu0
    %v186 = vadd.f32 %v89, %v185
    %v187 = vpop.f32.mrb[0].mxu0
    %v188 = vpop.f32.mrb[0].mxu0
    %189 = vdwg.mxu0
    %190 = vmatprep.subr.bf16.mxu0 %v123
    %191 = vmatpush1.bf16.msra.mxu0 %v122
    %192 = vmatprep.subr.bf16.mxu0 %v147
    %193 = vmatpush1.bf16.msra.mxu0 %v144
    %194 = vmatprep.subr.bf16.mxu0 0
    %195 = vmatpush1.bf16.msra.mxu0 0
    %196 = vmatprep.subr.bf16.mxu0 0
    %197 = vmatpush1.bf16.msra.mxu0 0
    %198 = vmatprep.subr.bf16.mxu0 0
    %199 = vmatpush1.bf16.msra.mxu0 0
    %200 = vmatprep.subr.bf16.mxu0 0
    %201 = vmatpush1.bf16.msra.mxu0 0
    %202 = vmatprep.subr.bf16.mxu0 0
    %203 = vmatpush1.bf16.msra.mxu0 0
    %204 = vmatprep.subr.bf16.mxu0 0
    %205 = vmatpush1.bf16.msra.mxu0 0
    %206 = vmatprep.subr.bf16.mxu0 0
    %207 = vmatpush1.bf16.msra.mxu0 0
    %208 = vmatprep.subr.bf16.mxu0 0
    %209 = vmatpush1.bf16.msra.mxu0 0
    %210 = vmatprep.subr.bf16.mxu0 0
    %211 = vmatpush1.bf16.msra.mxu0 0
    %212 = vmatprep.subr.bf16.mxu0 0
    %213 = vmatpush1.bf16.msra.mxu0 0
    %214 = vmatprep.subr.bf16.mxu0 0
    %215 = vmatpush1.bf16.msra.mxu0 0
    %216 = vmatprep.subr.bf16.mxu0 0
    %217 = vmatpush1.bf16.msra.mxu0 0
    %218 = vmatprep.subr.bf16.mxu0 0
    %219 = vmatpush1.bf16.msra.mxu0 0
    %220 = vmatprep.subr.bf16.mxu0 0
    %221 = vmatpush1.bf16.msra.mxu0 0
    %222 = vmatprep.mubr.bf16.mxu0 0
    %223 = vmatmul.mubr.bf16.gmra.mrb[0].mxu0 %v134
    %v224 = vpop.f32.mrb[0].mxu0
    %v225 = vadd.f32 %v93, %v224
    %v226 = vpop.f32.mrb[0].mxu0
    %v227 = vadd.f32 %v97, %v226
    %v228 = vpop.f32.mrb[0].mxu0
    %v229 = vpop.f32.mrb[0].mxu0
    %230 = vdwg.mxu0
    %v231 = vmul.f32 %v184, 0.01
    %v232 = vmul.f32 %v186, 0.01
    %v233 = vmul.f32 %v225, 0.01
    %v234 = vmul.f32 %v227, 0.01
    %v235 = vmax.f32 %v184, %v231
    %v236 = vmax.f32 %v186, %v232
    %v237 = vmax.f32 %v225, %v233
    %v238 = vmax.f32 %v227, %v234
    %v239 = vpack.c.bf16 %v235, %v235
    %v240 = vpack.c.bf16 %v236, %v236
    %v241 = vpack.c.bf16 %v237, %v237
    %v242 = vpack.c.bf16 %v238, %v238
    %v243 = vld [vmem:[#allocation4] sm:$0xff]
    %v244 = vld [vmem:[#allocation4 + $0x8] sm:$0xff]
    %v245 = vld [vmem:[#allocation4 + $0x10] sm:$0xff]
    %v246 = vld [vmem:[#allocation4 + $0x18] sm:$0xff]
    %v247 = vld [vmem:[#allocation4 + $0x20] sm:$0xff]
    %v248 = vld [vmem:[#allocation4 + $0x28] sm:$0xff]
    %v249 = vld [vmem:[#allocation4 + $0x30] sm:$0xff]
    %v250 = vld [vmem:[#allocation4 + $0x38] sm:$0xff]
    %v251 = vld [vmem:[#allocation4 + $0x40] sm:$0xff]
    %v252 = vld [vmem:[#allocation4 + $0x48] sm:$0xff]
    %v253 = vld [vmem:[#allocation4 + $0x50] sm:$0xff]
    %v254 = vld [vmem:[#allocation4 + $0x58] sm:$0xff]
    %v255 = vld [vmem:[#allocation4 + $0x60] sm:$0xff]
    %v256 = vld [vmem:[#allocation4 + $0x68] sm:$0xff]
    %v257 = vld [vmem:[#allocation4 + $0x70] sm:$0xff]
    %v258 = vld [vmem:[#allocation4 + $0x78] sm:$0xff]
    %v259 = vld [vmem:[#allocation4 + $0x80] sm:$0xff]
    %v260 = vld [vmem:[#allocation4 + $0x88] sm:$0xff]
    %v261 = vld [vmem:[#allocation4 + $0x90] sm:$0xff]
    %v262 = vld [vmem:[#allocation4 + $0x98] sm:$0xff]
    %v263 = vld [vmem:[#allocation4 + $0xa0] sm:$0xff]
    %v264 = vld [vmem:[#allocation4 + $0xa8] sm:$0xff]
    %v265 = vld [vmem:[#allocation4 + $0xb0] sm:$0xff]
    %v266 = vld [vmem:[#allocation4 + $0xb8] sm:$0xff]
    %v267 = vld [vmem:[#allocation4 + $0xc0] sm:$0xff]
    %v268 = vld [vmem:[#allocation4 + $0xc8] sm:$0xff]
    %v269 = vld [vmem:[#allocation4 + $0xd0] sm:$0xff]
    %v270 = vld [vmem:[#allocation4 + $0xd8] sm:$0xff]
    %v271 = vld [vmem:[#allocation4 + $0xe0] sm:$0xff]
    %v272 = vld [vmem:[#allocation4 + $0xe8] sm:$0xff]
    %v273 = vld [vmem:[#allocation4 + $0xf0] sm:$0xff]
    %v274 = vld [vmem:[#allocation4 + $0xf8] sm:$0xff]
    %v275 = vld [vmem:[#allocation4 + $0x100] sm:$0xff]
    %v276 = vld [vmem:[#allocation4 + $0x108] sm:$0xff]
    %v277 = vld [vmem:[#allocation4 + $0x110] sm:$0xff]
    %v278 = vld [vmem:[#allocation4 + $0x118] sm:$0xff]
    %v279 = vld [vmem:[#allocation4 + $0x120] sm:$0xff]
    %v280 = vld [vmem:[#allocation4 + $0x128] sm:$0xff]
    %v281 = vld [vmem:[#allocation4 + $0x130] sm:$0xff]
    %v282 = vld [vmem:[#allocation4 + $0x138] sm:$0xff]
    %v283 = vld [vmem:[#allocation4 + $0x140] sm:$0xff]
    %v284 = vld [vmem:[#allocation4 + $0x148] sm:$0xff]
    %v285 = vld [vmem:[#allocation4 + $0x150] sm:$0xff]
    %v286 = vld [vmem:[#allocation4 + $0x158] sm:$0xff]
    %v287 = vld [vmem:[#allocation4 + $0x160] sm:$0xff]
    %v288 = vld [vmem:[#allocation4 + $0x168] sm:$0xff]
    %v289 = vld [vmem:[#allocation4 + $0x170] sm:$0xff]
    %v290 = vld [vmem:[#allocation4 + $0x178] sm:$0xff]
    %v291 = vld [vmem:[#allocation4 + $0x180] sm:$0xff]
    %v292 = vld [vmem:[#allocation4 + $0x188] sm:$0xff]
    %v293 = vld [vmem:[#allocation4 + $0x190] sm:$0xff]
    %v294 = vld [vmem:[#allocation4 + $0x198] sm:$0xff]
    %v295 = vld [vmem:[#allocation4 + $0x1a0] sm:$0xff]
    %v296 = vld [vmem:[#allocation4 + $0x1a8] sm:$0xff]
    %v297 = vld [vmem:[#allocation4 + $0x1b0] sm:$0xff]
    %v298 = vld [vmem:[#allocation4 + $0x1b8] sm:$0xff]
    %v299 = vld [vmem:[#allocation4 + $0x1c0] sm:$0xff]
    %v300 = vld [vmem:[#allocation4 + $0x1c8] sm:$0xff]
    %v301 = vld [vmem:[#allocation4 + $0x1d0] sm:$0xff]
    %v302 = vld [vmem:[#allocation4 + $0x1d8] sm:$0xff]
    %v303 = vld [vmem:[#allocation4 + $0x1e0] sm:$0xff]
    %v304 = vld [vmem:[#allocation4 + $0x1e8] sm:$0xff]
    %v305 = vld [vmem:[#allocation4 + $0x1f0] sm:$0xff]
    %v306 = vld [vmem:[#allocation4 + $0x1f8] sm:$0xff]
    %v307 = vld [vmem:[%s4] sm:$0x3]
    %v309 = vlaneseq
    %v310 = vshrl.u32 %v309, 7
    %v311 = vsub.s32 0, %v310
    %v312 = vrot.slane %v307, %v311
    %v313 = vlaneseq
    %v314 = vshrl.u32 %v313, 7
    %v315 = vsub.s32 1, %v314
    %v316 = vrot.slane %v307, %v315
    %v383 = vunpack.c.l.b16 %v243
    %v384 = vunpack.c.h.b16 %v243
    %v385 = vunpack.c.l.b16 %v244
    %v386 = vunpack.c.h.b16 %v244
    %v387 = vunpack.c.l.b16 %v245
    %v388 = vunpack.c.h.b16 %v245
    %v389 = vunpack.c.l.b16 %v246
    %v390 = vunpack.c.h.b16 %v246
    %v391 = vunpack.c.l.b16 %v247
    %v392 = vunpack.c.h.b16 %v247
    %v393 = vunpack.c.l.b16 %v248
    %v394 = vunpack.c.h.b16 %v248
    %v395 = vunpack.c.l.b16 %v249
    %v396 = vunpack.c.h.b16 %v249
    %v397 = vunpack.c.l.b16 %v250
    %v398 = vunpack.c.h.b16 %v250
    %v399 = vunpack.c.l.b16 %v251
    %v400 = vunpack.c.h.b16 %v251
    %v401 = vunpack.c.l.b16 %v252
    %v402 = vunpack.c.h.b16 %v252
    %v403 = vunpack.c.l.b16 %v253
    %v404 = vunpack.c.h.b16 %v253
    %v405 = vunpack.c.l.b16 %v254
    %v406 = vunpack.c.h.b16 %v254
    %v407 = vunpack.c.l.b16 %v255
    %v408 = vunpack.c.h.b16 %v255
    %v409 = vunpack.c.l.b16 %v256
    %v410 = vunpack.c.h.b16 %v256
    %v411 = vunpack.c.l.b16 %v257
    %v412 = vunpack.c.h.b16 %v257
    %v413 = vunpack.c.l.b16 %v258
    %v414 = vunpack.c.h.b16 %v258
    %v415 = vunpack.c.l.b16 %v259
    %v416 = vunpack.c.h.b16 %v259
    %v417 = vunpack.c.l.b16 %v260
    %v418 = vunpack.c.h.b16 %v260
    %v419 = vunpack.c.l.b16 %v261
    %v420 = vunpack.c.h.b16 %v261
    %v421 = vunpack.c.l.b16 %v262
    %v422 = vunpack.c.h.b16 %v262
    %v423 = vunpack.c.l.b16 %v263
    %v424 = vunpack.c.h.b16 %v263
    %v425 = vunpack.c.l.b16 %v264
    %v426 = vunpack.c.h.b16 %v264
    %v427 = vunpack.c.l.b16 %v265
    %v428 = vunpack.c.h.b16 %v265
    %v429 = vunpack.c.l.b16 %v266
    %v430 = vunpack.c.h.b16 %v266
    %v431 = vunpack.c.l.b16 %v267
    %v432 = vunpack.c.h.b16 %v267
    %v433 = vunpack.c.l.b16 %v268
    %v434 = vunpack.c.h.b16 %v268
    %v435 = vunpack.c.l.b16 %v269
    %v436 = vunpack.c.h.b16 %v269
    %v437 = vunpack.c.l.b16 %v270
    %v438 = vunpack.c.h.b16 %v270
    %v439 = vunpack.c.l.b16 %v271
    %v440 = vunpack.c.h.b16 %v271
    %v441 = vunpack.c.l.b16 %v272
    %v442 = vunpack.c.h.b16 %v272
    %v443 = vunpack.c.l.b16 %v273
    %v444 = vunpack.c.h.b16 %v273
    %v445 = vunpack.c.l.b16 %v274
    %v446 = vunpack.c.h.b16 %v274
    %v447 = vunpack.c.l.b16 %v275
    %v448 = vunpack.c.h.b16 %v275
    %v449 = vunpack.c.l.b16 %v276
    %v450 = vunpack.c.h.b16 %v276
    %v451 = vunpack.c.l.b16 %v277
    %v452 = vunpack.c.h.b16 %v277
    %v453 = vunpack.c.l.b16 %v278
    %v454 = vunpack.c.h.b16 %v278
    %v455 = vunpack.c.l.b16 %v279
    %v456 = vunpack.c.h.b16 %v279
    %v457 = vunpack.c.l.b16 %v280
    %v458 = vunpack.c.h.b16 %v280
    %v459 = vunpack.c.l.b16 %v281
    %v460 = vunpack.c.h.b16 %v281
    %v461 = vunpack.c.l.b16 %v282
    %v462 = vunpack.c.h.b16 %v282
    %v463 = vunpack.c.l.b16 %v283
    %v464 = vunpack.c.h.b16 %v283
    %v465 = vunpack.c.l.b16 %v284
    %v466 = vunpack.c.h.b16 %v284
    %v467 = vunpack.c.l.b16 %v285
    %v468 = vunpack.c.h.b16 %v285
    %v469 = vunpack.c.l.b16 %v286
    %v470 = vunpack.c.h.b16 %v286
    %v471 = vunpack.c.l.b16 %v287
    %v472 = vunpack.c.h.b16 %v287
    %v473 = vunpack.c.l.b16 %v288
    %v474 = vunpack.c.h.b16 %v288
    %v475 = vunpack.c.l.b16 %v289
    %v476 = vunpack.c.h.b16 %v289
    %v477 = vunpack.c.l.b16 %v290
    %v478 = vunpack.c.h.b16 %v290
    %v479 = vunpack.c.l.b16 %v291
    %v480 = vunpack.c.h.b16 %v291
    %v481 = vunpack.c.l.b16 %v292
    %v482 = vunpack.c.h.b16 %v292
    %v483 = vunpack.c.l.b16 %v293
    %v484 = vunpack.c.h.b16 %v293
    %v485 = vunpack.c.l.b16 %v294
    %v486 = vunpack.c.h.b16 %v294
    %v487 = vunpack.c.l.b16 %v295
    %v488 = vunpack.c.h.b16 %v295
    %v489 = vunpack.c.l.b16 %v296
    %v490 = vunpack.c.h.b16 %v296
    %v491 = vunpack.c.l.b16 %v297
    %v492 = vunpack.c.h.b16 %v297
    %v493 = vunpack.c.l.b16 %v298
    %v494 = vunpack.c.h.b16 %v298
    %v495 = vunpack.c.l.b16 %v299
    %v496 = vunpack.c.h.b16 %v299
    %v497 = vunpack.c.l.b16 %v300
    %v498 = vunpack.c.h.b16 %v300
    %v499 = vunpack.c.l.b16 %v301
    %v500 = vunpack.c.h.b16 %v301
    %v501 = vunpack.c.l.b16 %v302
    %v502 = vunpack.c.h.b16 %v302
    %v503 = vunpack.c.l.b16 %v303
    %v504 = vunpack.c.h.b16 %v303
    %v505 = vunpack.c.l.b16 %v304
    %v506 = vunpack.c.h.b16 %v304
    %v507 = vunpack.c.l.b16 %v305
    %v508 = vunpack.c.h.b16 %v305
    %v509 = vunpack.c.l.b16 %v306
    %v510 = vunpack.c.h.b16 %v306
    %v511 = vpack.c.b16 %v385, %v383
    %v512 = vpack.c.b16 %v386, %v384
    %v513 = vpack.c.b16 %v389, %v387
    %v514 = vpack.c.b16 %v390, %v388
    %v515 = vpack.c.b16 %v393, %v391
    %v516 = vpack.c.b16 %v394, %v392
    %v517 = vpack.c.b16 %v397, %v395
    %v518 = vpack.c.b16 %v398, %v396
    %v519 = vpack.c.b16 %v401, %v399
    %v520 = vpack.c.b16 %v402, %v400
    %v521 = vpack.c.b16 %v405, %v403
    %v522 = vpack.c.b16 %v406, %v404
    %v523 = vpack.c.b16 %v409, %v407
    %v524 = vpack.c.b16 %v410, %v408
    %v525 = vpack.c.b16 %v413, %v411
    %v526 = vpack.c.b16 %v414, %v412
    %v527 = vpack.c.b16 %v417, %v415
    %v528 = vpack.c.b16 %v418, %v416
    %v529 = vpack.c.b16 %v421, %v419
    %v530 = vpack.c.b16 %v422, %v420
    %v531 = vpack.c.b16 %v425, %v423
    %v532 = vpack.c.b16 %v426, %v424
    %v533 = vpack.c.b16 %v429, %v427
    %v534 = vpack.c.b16 %v430, %v428
    %v535 = vpack.c.b16 %v433, %v431
    %v536 = vpack.c.b16 %v434, %v432
    %v537 = vpack.c.b16 %v437, %v435
    %v538 = vpack.c.b16 %v438, %v436
    %v539 = vpack.c.b16 %v441, %v439
    %v540 = vpack.c.b16 %v442, %v440
    %v541 = vpack.c.b16 %v445, %v443
    %v542 = vpack.c.b16 %v446, %v444
    %v543 = vpack.c.b16 %v449, %v447
    %v544 = vpack.c.b16 %v450, %v448
    %v545 = vpack.c.b16 %v453, %v451
    %v546 = vpack.c.b16 %v454, %v452
    %v547 = vpack.c.b16 %v457, %v455
    %v548 = vpack.c.b16 %v458, %v456
    %v549 = vpack.c.b16 %v461, %v459
    %v550 = vpack.c.b16 %v462, %v460
    %v551 = vpack.c.b16 %v465, %v463
    %v552 = vpack.c.b16 %v466, %v464
    %v553 = vpack.c.b16 %v469, %v467
    %v554 = vpack.c.b16 %v470, %v468
    %v555 = vpack.c.b16 %v473, %v471
    %v556 = vpack.c.b16 %v474, %v472
    %v557 = vpack.c.b16 %v477, %v475
    %v558 = vpack.c.b16 %v478, %v476
    %v559 = vpack.c.b16 %v481, %v479
    %v560 = vpack.c.b16 %v482, %v480
    %v561 = vpack.c.b16 %v485, %v483
    %v562 = vpack.c.b16 %v486, %v484
    %v563 = vpack.c.b16 %v489, %v487
    %v564 = vpack.c.b16 %v490, %v488
    %v565 = vpack.c.b16 %v493, %v491
    %v566 = vpack.c.b16 %v494, %v492
    %v567 = vpack.c.b16 %v497, %v495
    %v568 = vpack.c.b16 %v498, %v496
    %v569 = vpack.c.b16 %v501, %v499
    %v570 = vpack.c.b16 %v502, %v500
    %v571 = vpack.c.b16 %v505, %v503
    %v572 = vpack.c.b16 %v506, %v504
    %v573 = vpack.c.b16 %v509, %v507
    %v574 = vpack.c.b16 %v510, %v508
    %639 = vmatprep.subr.bf16.mxu0 %v512
    %640 = vmatpush1.bf16.msra.mxu0 %v511
    %641 = vmatprep.subr.bf16.mxu0 %v514
    %642 = vmatpush1.bf16.msra.mxu0 %v513
    %643 = vmatprep.subr.bf16.mxu0 %v516
    %644 = vmatpush1.bf16.msra.mxu0 %v515
    %645 = vmatprep.subr.bf16.mxu0 %v518
    %646 = vmatpush1.bf16.msra.mxu0 %v517
    %647 = vmatprep.subr.bf16.mxu0 %v520
    %648 = vmatpush1.bf16.msra.mxu0 %v519
    %649 = vmatprep.subr.bf16.mxu0 %v522
    %650 = vmatpush1.bf16.msra.mxu0 %v521
    %651 = vmatprep.subr.bf16.mxu0 %v524
    %652 = vmatpush1.bf16.msra.mxu0 %v523
    %653 = vmatprep.subr.bf16.mxu0 %v526
    %654 = vmatpush1.bf16.msra.mxu0 %v525
    %655 = vmatprep.subr.bf16.mxu0 %v528
    %656 = vmatpush1.bf16.msra.mxu0 %v527
    %657 = vmatprep.subr.bf16.mxu0 %v530
    %658 = vmatpush1.bf16.msra.mxu0 %v529
    %659 = vmatprep.subr.bf16.mxu0 %v532
    %660 = vmatpush1.bf16.msra.mxu0 %v531
    %661 = vmatprep.subr.bf16.mxu0 %v534
    %662 = vmatpush1.bf16.msra.mxu0 %v533
    %663 = vmatprep.subr.bf16.mxu0 %v536
    %664 = vmatpush1.bf16.msra.mxu0 %v535
    %665 = vmatprep.subr.bf16.mxu0 %v538
    %666 = vmatpush1.bf16.msra.mxu0 %v537
    %667 = vmatprep.subr.bf16.mxu0 %v540
    %668 = vmatpush1.bf16.msra.mxu0 %v539
    %669 = vmatprep.subr.bf16.mxu0 %v542
    %670 = vmatpush1.bf16.msra.mxu0 %v541
    %671 = vmatprep.mubr.bf16.mxu0 %v240
    %672 = vmatmul.mubr.bf16.gmra.mrb[0].mxu0 %v239
    %v673 = vpop.f32.mrb[0].mxu0
    %v674 = vadd.f32 %v312, %v673
    %v675 = vpop.f32.mrb[0].mxu0
    %v676 = vadd.f32 %v316, %v675
    %v677 = vpop.f32.mrb[0].mxu0
    %v678 = vpop.f32.mrb[0].mxu0
    %679 = vdwg.mxu0
    %680 = vmatprep.subr.bf16.mxu0 %v544
    %681 = vmatpush1.bf16.msra.mxu0 %v543
    %682 = vmatprep.subr.bf16.mxu0 %v546
    %683 = vmatpush1.bf16.msra.mxu0 %v545
    %684 = vmatprep.subr.bf16.mxu0 %v548
    %685 = vmatpush1.bf16.msra.mxu0 %v547
    %686 = vmatprep.subr.bf16.mxu0 %v550
    %687 = vmatpush1.bf16.msra.mxu0 %v549
    %688 = vmatprep.subr.bf16.mxu0 %v552
    %689 = vmatpush1.bf16.msra.mxu0 %v551
    %690 = vmatprep.subr.bf16.mxu0 %v554
    %691 = vmatpush1.bf16.msra.mxu0 %v553
    %692 = vmatprep.subr.bf16.mxu0 %v556
    %693 = vmatpush1.bf16.msra.mxu0 %v555
    %694 = vmatprep.subr.bf16.mxu0 %v558
    %695 = vmatpush1.bf16.msra.mxu0 %v557
    %696 = vmatprep.subr.bf16.mxu0 %v560
    %697 = vmatpush1.bf16.msra.mxu0 %v559
    %698 = vmatprep.subr.bf16.mxu0 %v562
    %699 = vmatpush1.bf16.msra.mxu0 %v561
    %700 = vmatprep.subr.bf16.mxu0 %v564
    %701 = vmatpush1.bf16.msra.mxu0 %v563
    %702 = vmatprep.subr.bf16.mxu0 %v566
    %703 = vmatpush1.bf16.msra.mxu0 %v565
    %704 = vmatprep.subr.bf16.mxu0 %v568
    %705 = vmatpush1.bf16.msra.mxu0 %v567
    %706 = vmatprep.subr.bf16.mxu0 %v570
    %707 = vmatpush1.bf16.msra.mxu0 %v569
    %708 = vmatprep.subr.bf16.mxu0 %v572
    %709 = vmatpush1.bf16.msra.mxu0 %v571
    %710 = vmatprep.subr.bf16.mxu0 %v574
    %711 = vmatpush1.bf16.msra.mxu0 %v573
    %712 = vmatprep.mubr.bf16.mxu0 %v242
    %713 = vmatmul.mubr.bf16.gmra.mrb[0].mxu0 %v241
    %v714 = vpop.f32.mrb[0].mxu0
    %v715 = vadd.f32 %v674, %v714
    %v716 = vpop.f32.mrb[0].mxu0
    %v717 = vadd.f32 %v676, %v716
    %v718 = vpop.f32.mrb[0].mxu0
    %v719 = vpop.f32.mrb[0].mxu0
    %720 = vdwg.mxu0
    %v721 = vmul.f32 %v715, 0.01
    %v722 = vmul.f32 %v717, 0.01
    %v723 = vmax.f32 %v715, %v721
    %v724 = vmax.f32 %v717, %v722
    %v725 = vpack.c.bf16 %v723, %v723
    %v726 = vpack.c.bf16 %v724, %v724
    %v727 = vld [vmem:[%s5] sm:$0xf]
    %v728 = vld [vmem:[%s5 + $0x4] sm:$0xf]
    %v729 = vld [vmem:[%s5 + $0x8] sm:$0xf]
    %v730 = vld [vmem:[%s5 + $0xc] sm:$0xf]
    %v731 = vld [vmem:[%s5 + $0x10] sm:$0xf]
    %v732 = vld [vmem:[%s5 + $0x14] sm:$0xf]
    %v733 = vld [vmem:[%s5 + $0x18] sm:$0xf]
    %v734 = vld [vmem:[%s5 + $0x1c] sm:$0xf]
    %v735 = vld [vmem:[%s5 + $0x20] sm:$0xf]
    %v736 = vld [vmem:[%s5 + $0x24] sm:$0xf]
    %v737 = vld [vmem:[%s5 + $0x28] sm:$0xf]
    %v738 = vld [vmem:[%s5 + $0x2c] sm:$0xf]
    %v739 = vld [vmem:[%s5 + $0x30] sm:$0xf]
    %v740 = vld [vmem:[%s5 + $0x34] sm:$0xf]
    %v741 = vld [vmem:[%s5 + $0x38] sm:$0xf]
    %v742 = vld [vmem:[%s5 + $0x3c] sm:$0xf]
    %v743 = vld [vmem:[%s5 + $0x40] sm:$0xf]
    %v744 = vld [vmem:[%s5 + $0x44] sm:$0xf]
    %v745 = vld [vmem:[%s5 + $0x48] sm:$0xf]
    %v746 = vld [vmem:[%s5 + $0x4c] sm:$0xf]
    %v747 = vld [vmem:[%s5 + $0x50] sm:$0xf]
    %v748 = vld [vmem:[%s5 + $0x54] sm:$0xf]
    %v749 = vld [vmem:[%s5 + $0x58] sm:$0xf]
    %v750 = vld [vmem:[%s5 + $0x5c] sm:$0xf]
    %v751 = vld [vmem:[%s5 + $0x60] sm:$0xf]
    %v752 = vld [vmem:[%s5 + $0x64] sm:$0xf]
    %v753 = vld [vmem:[%s5 + $0x68] sm:$0xf]
    %v754 = vld [vmem:[%s5 + $0x6c] sm:$0xf]
    %v755 = vld [vmem:[%s5 + $0x70] sm:$0xf]
    %v756 = vld [vmem:[%s5 + $0x74] sm:$0xf]
    %v757 = vld [vmem:[%s5 + $0x78] sm:$0xf]
    %v758 = vld [vmem:[%s5 + $0x7c] sm:$0xf]
    %v759 = vld [vmem:[%s6] sm:$0x1]
    %v761 = vlaneseq
    %v762 = vshrl.u32 %v761, 7
    %v763 = vsub.s32 0, %v762
    %v764 = vrot.slane %v759, %v763
    %v798 = vunpack.c.l.b16 %v727
    %v799 = vunpack.c.l.b16 %v728
    %v800 = vunpack.c.l.b16 %v729
    %v801 = vunpack.c.l.b16 %v730
    %v802 = vunpack.c.l.b16 %v731
    %v803 = vunpack.c.l.b16 %v732
    %v804 = vunpack.c.l.b16 %v733
    %v805 = vunpack.c.l.b16 %v734
    %v806 = vunpack.c.l.b16 %v735
    %v807 = vunpack.c.l.b16 %v736
    %v808 = vunpack.c.l.b16 %v737
    %v809 = vunpack.c.l.b16 %v738
    %v810 = vunpack.c.l.b16 %v739
    %v811 = vunpack.c.l.b16 %v740
    %v812 = vunpack.c.l.b16 %v741
    %v813 = vunpack.c.l.b16 %v742
    %v814 = vunpack.c.l.b16 %v743
    %v815 = vunpack.c.l.b16 %v744
    %v816 = vunpack.c.l.b16 %v745
    %v817 = vunpack.c.l.b16 %v746
    %v818 = vunpack.c.l.b16 %v747
    %v819 = vunpack.c.l.b16 %v748
    %v820 = vunpack.c.l.b16 %v749
    %v821 = vunpack.c.l.b16 %v750
    %v822 = vunpack.c.l.b16 %v751
    %v823 = vunpack.c.l.b16 %v752
    %v824 = vunpack.c.l.b16 %v753
    %v825 = vunpack.c.l.b16 %v754
    %v826 = vunpack.c.l.b16 %v755
    %v827 = vunpack.c.l.b16 %v756
    %v828 = vunpack.c.l.b16 %v757
    %v829 = vunpack.c.l.b16 %v758
    %v830 = vpack.c.b16 %v799, %v798
    %v831 = vpack.c.b16 %v801, %v800
    %v832 = vpack.c.b16 %v803, %v802
    %v833 = vpack.c.b16 %v805, %v804
    %v834 = vpack.c.b16 %v807, %v806
    %v835 = vpack.c.b16 %v809, %v808
    %v836 = vpack.c.b16 %v811, %v810
    %v837 = vpack.c.b16 %v813, %v812
    %v838 = vpack.c.b16 %v815, %v814
    %v839 = vpack.c.b16 %v817, %v816
    %v840 = vpack.c.b16 %v819, %v818
    %v841 = vpack.c.b16 %v821, %v820
    %v842 = vpack.c.b16 %v823, %v822
    %v843 = vpack.c.b16 %v825, %v824
    %v844 = vpack.c.b16 %v827, %v826
    %v845 = vpack.c.b16 %v829, %v828
    %862 = vmatprep.subr.bf16.mxu0 0
    %863 = vmatpush1.bf16.msra.mxu0 %v830
    %864 = vmatprep.subr.bf16.mxu0 0
    %865 = vmatpush1.bf16.msra.mxu0 %v831
    %866 = vmatprep.subr.bf16.mxu0 0
    %867 = vmatpush1.bf16.msra.mxu0 %v832
    %868 = vmatprep.subr.bf16.mxu0 0
    %869 = vmatpush1.bf16.msra.mxu0 %v833
    %870 = vmatprep.subr.bf16.mxu0 0
    %871 = vmatpush1.bf16.msra.mxu0 %v834
    %872 = vmatprep.subr.bf16.mxu0 0
    %873 = vmatpush1.bf16.msra.mxu0 %v835
    %874 = vmatprep.subr.bf16.mxu0 0
    %875 = vmatpush1.bf16.msra.mxu0 %v836
    %876 = vmatprep.subr.bf16.mxu0 0
    %877 = vmatpush1.bf16.msra.mxu0 %v837
    %878 = vmatprep.subr.bf16.mxu0 0
    %879 = vmatpush1.bf16.msra.mxu0 %v838
    %880 = vmatprep.subr.bf16.mxu0 0
    %881 = vmatpush1.bf16.msra.mxu0 %v839
    %882 = vmatprep.subr.bf16.mxu0 0
    %883 = vmatpush1.bf16.msra.mxu0 %v840
    %884 = vmatprep.subr.bf16.mxu0 0
    %885 = vmatpush1.bf16.msra.mxu0 %v841
    %886 = vmatprep.subr.bf16.mxu0 0
    %887 = vmatpush1.bf16.msra.mxu0 %v842
    %888 = vmatprep.subr.bf16.mxu0 0
    %889 = vmatpush1.bf16.msra.mxu0 %v843
    %890 = vmatprep.subr.bf16.mxu0 0
    %891 = vmatpush1.bf16.msra.mxu0 %v844
    %892 = vmatprep.subr.bf16.mxu0 0
    %893 = vmatpush1.bf16.msra.mxu0 %v845
    %894 = vmatprep.mubr.bf16.mxu0 %v726
    %895 = vmatmul.mubr.bf16.gmra.mrb[0].mxu0 %v725
    %v896 = vpop.f32.mrb[0].mxu0
    %v897 = vadd.f32 %v764, %v896
    %v898 = vpop.f32.mrb[0].mxu0
    %v899 = vpop.f32.mrb[0].mxu0
    %v900 = vpop.f32.mrb[0].mxu0
    %901 = vdwg.mxu0
    %v902 = vmul.f32 %v897, 0.01
    %v903 = vmax.f32 %v897, %v902
    %v904 = vpack.c.bf16 %v903, %v903
    %v905 = vld [vmem:[%s7] sm:$0xf]
    %v906 = vld [vmem:[%s7 + $0x4] sm:$0xf]
    %v907 = vld [vmem:[%s7 + $0x8] sm:$0xf]
    %v908 = vld [vmem:[%s7 + $0xc] sm:$0xf]
    %v909 = vld [vmem:[%s7 + $0x10] sm:$0xf]
    %v910 = vld [vmem:[%s7 + $0x14] sm:$0xf]
    %v911 = vld [vmem:[%s7 + $0x18] sm:$0xf]
    %v912 = vld [vmem:[%s7 + $0x1c] sm:$0xf]
    %v913 = vld [vmem:[%s7 + $0x20] sm:$0xf]
    %v914 = vld [vmem:[%s7 + $0x24] sm:$0xf]
    %v915 = vld [vmem:[%s7 + $0x28] sm:$0xf]
    %v916 = vld [vmem:[%s7 + $0x2c] sm:$0xf]
    %v917 = vld [vmem:[%s7 + $0x30] sm:$0xf]
    %v918 = vld [vmem:[%s7 + $0x34] sm:$0xf]
    %v919 = vld [vmem:[%s7 + $0x38] sm:$0xf]
    %v920 = vld [vmem:[%s7 + $0x3c] sm:$0xf]
    %v921 = vld [vmem:[%s8] sm:$0x1]
    %v923 = vlaneseq
    %v924 = vshrl.u32 %v923, 7
    %v925 = vsub.s32 0, %v924
    %v926 = vrot.slane %v921, %v925
    %v944 = vunpack.c.l.b16 %v905
    %v945 = vunpack.c.l.b16 %v906
    %v946 = vunpack.c.l.b16 %v907
    %v947 = vunpack.c.l.b16 %v908
    %v948 = vunpack.c.l.b16 %v909
    %v949 = vunpack.c.l.b16 %v910
    %v950 = vunpack.c.l.b16 %v911
    %v951 = vunpack.c.l.b16 %v912
    %v952 = vunpack.c.l.b16 %v913
    %v953 = vunpack.c.l.b16 %v914
    %v954 = vunpack.c.l.b16 %v915
    %v955 = vunpack.c.l.b16 %v916
    %v956 = vunpack.c.l.b16 %v917
    %v957 = vunpack.c.l.b16 %v918
    %v958 = vunpack.c.l.b16 %v919
    %v959 = vunpack.c.l.b16 %v920
    %v960 = vpack.c.b16 %v945, %v944
    %v961 = vpack.c.b16 %v947, %v946
    %v962 = vpack.c.b16 %v949, %v948
    %v963 = vpack.c.b16 %v951, %v950
    %v964 = vpack.c.b16 %v953, %v952
    %v965 = vpack.c.b16 %v955, %v954
    %v966 = vpack.c.b16 %v957, %v956
    %v967 = vpack.c.b16 %v959, %v958
    %976 = vmatprep.subr.bf16.mxu0 0
    %977 = vmatpush1.bf16.msra.mxu0 %v960
    %978 = vmatprep.subr.bf16.mxu0 0
    %979 = vmatpush1.bf16.msra.mxu0 %v961
    %980 = vmatprep.subr.bf16.mxu0 0
    %981 = vmatpush1.bf16.msra.mxu0 %v962
    %982 = vmatprep.subr.bf16.mxu0 0
    %983 = vmatpush1.bf16.msra.mxu0 %v963
    %984 = vmatprep.subr.bf16.mxu0 0
    %985 = vmatpush1.bf16.msra.mxu0 %v964
    %986 = vmatprep.subr.bf16.mxu0 0
    %987 = vmatpush1.bf16.msra.mxu0 %v965
    %988 = vmatprep.subr.bf16.mxu0 0
    %989 = vmatpush1.bf16.msra.mxu0 %v966
    %990 = vmatprep.subr.bf16.mxu0 0
    %991 = vmatpush1.bf16.msra.mxu0 %v967
    %992 = vmatprep.subr.bf16.mxu0 0
    %993 = vmatpush1.bf16.msra.mxu0 0
    %994 = vmatprep.subr.bf16.mxu0 0
    %995 = vmatpush1.bf16.msra.mxu0 0
    %996 = vmatprep.subr.bf16.mxu0 0
    %997 = vmatpush1.bf16.msra.mxu0 0
    %998 = vmatprep.subr.bf16.mxu0 0
    %999 = vmatpush1.bf16.msra.mxu0 0
    %1000 = vmatprep.subr.bf16.mxu0 0
    %1001 = vmatpush1.bf16.msra.mxu0 0
    %1002 = vmatprep.subr.bf16.mxu0 0
    %1003 = vmatpush1.bf16.msra.mxu0 0
    %1004 = vmatprep.subr.bf16.mxu0 0
    %1005 = vmatpush1.bf16.msra.mxu0 0
    %1006 = vmatprep.subr.bf16.mxu0 0
    %1007 = vmatpush1.bf16.msra.mxu0 0
    %1008 = vmatprep.mubr.bf16.mxu0 0
    %1009 = vmatmul.mubr.bf16.gmra.mrb[0].mxu0 %v904
    %v1010 = vpop.f32.mrb[0].mxu0
    %v1011 = vadd.f32 %v926, %v1010
    %v1012 = vpop.f32.mrb[0].mxu0
    %v1013 = vpop.f32.mrb[0].mxu0
    %v1014 = vpop.f32.mrb[0].mxu0
    %1015 = vdwg.mxu0
    %v1016 = vmul.f32 %v1011, 0.01
    %v1017 = vmax.f32 %v1011, %v1016
    %v1018 = vpack.c.bf16 %v1017, %v1017
    %v1019 = vld [vmem:[%s9] sm:$0xf]
    %v1020 = vld [vmem:[%s9 + $0x4] sm:$0xf]
    %v1021 = vld [vmem:[%s9 + $0x8] sm:$0xf]
    %v1022 = vld [vmem:[%s9 + $0xc] sm:$0xf]
    %v1023 = vld [vmem:[%s9 + $0x10] sm:$0xf]
    %v1024 = vld [vmem:[%s9 + $0x14] sm:$0xf]
    %v1025 = vld [vmem:[%s9 + $0x18] sm:$0xf]
    %v1026 = vld [vmem:[%s9 + $0x1c] sm:$0xf]
    %v1027 = vld [vmem:[%s9 + $0x20] sm:$0xf]
    %v1028 = vld [vmem:[%s9 + $0x24] sm:$0xf]
    %v1029 = vld [vmem:[%s9 + $0x28] sm:$0xf]
    %v1030 = vld [vmem:[%s9 + $0x2c] sm:$0xf]
    %v1031 = vld [vmem:[%s9 + $0x30] sm:$0xf]
    %v1032 = vld [vmem:[%s9 + $0x34] sm:$0xf]
    %v1033 = vld [vmem:[%s9 + $0x38] sm:$0xf]
    %v1034 = vld [vmem:[%s9 + $0x3c] sm:$0xf]
    %v1035 = vld [vmem:[%s10] sm:$0x1]
    %v1037 = vlaneseq
    %v1038 = vshrl.u32 %v1037, 7
    %v1039 = vsub.s32 0, %v1038
    %v1040 = vrot.slane %v1035, %v1039
    %v1058 = vunpack.c.l.b16 %v1019
    %v1059 = vunpack.c.l.b16 %v1020
    %v1060 = vunpack.c.l.b16 %v1021
    %v1061 = vunpack.c.l.b16 %v1022
    %v1062 = vunpack.c.l.b16 %v1023
    %v1063 = vunpack.c.l.b16 %v1024
    %v1064 = vunpack.c.l.b16 %v1025
    %v1065 = vunpack.c.l.b16 %v1026
    %v1066 = vunpack.c.l.b16 %v1027
    %v1067 = vunpack.c.l.b16 %v1028
    %v1068 = vunpack.c.l.b16 %v1029
    %v1069 = vunpack.c.l.b16 %v1030
    %v1070 = vunpack.c.l.b16 %v1031
    %v1071 = vunpack.c.l.b16 %v1032
    %v1072 = vunpack.c.l.b16 %v1033
    %v1073 = vunpack.c.l.b16 %v1034
    %v1074 = vpack.c.b16 %v1059, %v1058
    %v1075 = vpack.c.b16 %v1061, %v1060
    %v1076 = vpack.c.b16 %v1063, %v1062
    %v1077 = vpack.c.b16 %v1065, %v1064
    %v1078 = vpack.c.b16 %v1067, %v1066
    %v1079 = vpack.c.b16 %v1069, %v1068
    %v1080 = vpack.c.b16 %v1071, %v1070
    %v1081 = vpack.c.b16 %v1073, %v1072
    %1090 = vmatprep.subr.bf16.mxu0 0
    %1091 = vmatpush1.bf16.msra.mxu0 %v1074
    %1092 = vmatprep.subr.bf16.mxu0 0
    %1093 = vmatpush1.bf16.msra.mxu0 %v1075
    %1094 = vmatprep.subr.bf16.mxu0 0
    %1095 = vmatpush1.bf16.msra.mxu0 %v1076
    %1096 = vmatprep.subr.bf16.mxu0 0
    %1097 = vmatpush1.bf16.msra.mxu0 %v1077
    %1098 = vmatprep.subr.bf16.mxu0 0
    %1099 = vmatpush1.bf16.msra.mxu0 %v1078
    %1100 = vmatprep.subr.bf16.mxu0 0
    %1101 = vmatpush1.bf16.msra.mxu0 %v1079
    %1102 = vmatprep.subr.bf16.mxu0 0
    %1103 = vmatpush1.bf16.msra.mxu0 %v1080
    %1104 = vmatprep.subr.bf16.mxu0 0
    %1105 = vmatpush1.bf16.msra.mxu0 %v1081
    %1106 = vmatprep.subr.bf16.mxu0 0
    %1107 = vmatpush1.bf16.msra.mxu0 0
    %1108 = vmatprep.subr.bf16.mxu0 0
    %1109 = vmatpush1.bf16.msra.mxu0 0
    %1110 = vmatprep.subr.bf16.mxu0 0
    %1111 = vmatpush1.bf16.msra.mxu0 0
    %1112 = vmatprep.subr.bf16.mxu0 0
    %1113 = vmatpush1.bf16.msra.mxu0 0
    %1114 = vmatprep.subr.bf16.mxu0 0
    %1115 = vmatpush1.bf16.msra.mxu0 0
    %1116 = vmatprep.subr.bf16.mxu0 0
    %1117 = vmatpush1.bf16.msra.mxu0 0
    %1118 = vmatprep.subr.bf16.mxu0 0
    %1119 = vmatpush1.bf16.msra.mxu0 0
    %1120 = vmatprep.subr.bf16.mxu0 0
    %1121 = vmatpush1.bf16.msra.mxu0 0
    %1122 = vmatprep.mubr.bf16.mxu0 0
    %1123 = vmatmul.mubr.bf16.gmra.mrb[0].mxu0 %v1018
    %v1124 = vpop.f32.mrb[0].mxu0
    %v1125 = vadd.f32 %v1040, %v1124
    %v1126 = vpop.f32.mrb[0].mxu0
    %v1127 = vpop.f32.mrb[0].mxu0
    %v1128 = vpop.f32.mrb[0].mxu0
    %1129 = vdwg.mxu0
    %v1130 = vmul.f32 %v1125, 0.01
    %v1131 = vmax.f32 %v1125, %v1130
    %v1132 = vpack.c.bf16 %v1131, %v1131
    %v1133 = vld [vmem:[%s11] sm:$0xf]
    %v1134 = vld [vmem:[%s11 + $0x4] sm:$0xf]
    %v1135 = vld [vmem:[%s11 + $0x8] sm:$0xf]
    %v1136 = vld [vmem:[%s11 + $0xc] sm:$0xf]
    %v1137 = vld [vmem:[%s11 + $0x10] sm:$0xf]
    %v1138 = vld [vmem:[%s11 + $0x14] sm:$0xf]
    %v1139 = vld [vmem:[%s11 + $0x18] sm:$0xf]
    %v1140 = vld [vmem:[%s11 + $0x1c] sm:$0xf]
    %v1141 = vld [vmem:[%s11 + $0x20] sm:$0xf]
    %v1142 = vld [vmem:[%s11 + $0x24] sm:$0xf]
    %v1143 = vld [vmem:[%s11 + $0x28] sm:$0xf]
    %v1144 = vld [vmem:[%s11 + $0x2c] sm:$0xf]
    %v1145 = vld [vmem:[%s11 + $0x30] sm:$0xf]
    %v1146 = vld [vmem:[%s11 + $0x34] sm:$0xf]
    %v1147 = vld [vmem:[%s11 + $0x38] sm:$0xf]
    %v1148 = vld [vmem:[%s11 + $0x3c] sm:$0xf]
    %v1149 = vld [vmem:[%s12] sm:$0x1]
    %v1151 = vlaneseq
    %v1152 = vshrl.u32 %v1151, 7
    %v1153 = vsub.s32 0, %v1152
    %v1154 = vrot.slane %v1149, %v1153
    %v1172 = vunpack.c.l.b16 %v1133
    %v1173 = vunpack.c.l.b16 %v1134
    %v1174 = vunpack.c.l.b16 %v1135
    %v1175 = vunpack.c.l.b16 %v1136
    %v1176 = vunpack.c.l.b16 %v1137
    %v1177 = vunpack.c.l.b16 %v1138
    %v1178 = vunpack.c.l.b16 %v1139
    %v1179 = vunpack.c.l.b16 %v1140
    %v1180 = vunpack.c.l.b16 %v1141
    %v1181 = vunpack.c.l.b16 %v1142
    %v1182 = vunpack.c.l.b16 %v1143
    %v1183 = vunpack.c.l.b16 %v1144
    %v1184 = vunpack.c.l.b16 %v1145
    %v1185 = vunpack.c.l.b16 %v1146
    %v1186 = vunpack.c.l.b16 %v1147
    %v1187 = vunpack.c.l.b16 %v1148
    %v1188 = vpack.c.b16 %v1173, %v1172
    %v1189 = vpack.c.b16 %v1175, %v1174
    %v1190 = vpack.c.b16 %v1177, %v1176
    %v1191 = vpack.c.b16 %v1179, %v1178
    %v1192 = vpack.c.b16 %v1181, %v1180
    %v1193 = vpack.c.b16 %v1183, %v1182
    %v1194 = vpack.c.b16 %v1185, %v1184
    %v1195 = vpack.c.b16 %v1187, %v1186
    %1204 = vmatprep.subr.bf16.mxu0 0
    %1205 = vmatpush1.bf16.msra.mxu0 %v1188
    %1206 = vmatprep.subr.bf16.mxu0 0
    %1207 = vmatpush1.bf16.msra.mxu0 %v1189
    %1208 = vmatprep.subr.bf16.mxu0 0
    %1209 = vmatpush1.bf16.msra.mxu0 %v1190
    %1210 = vmatprep.subr.bf16.mxu0 0
    %1211 = vmatpush1.bf16.msra.mxu0 %v1191
    %1212 = vmatprep.subr.bf16.mxu0 0
    %1213 = vmatpush1.bf16.msra.mxu0 %v1192
    %1214 = vmatprep.subr.bf16.mxu0 0
    %1215 = vmatpush1.bf16.msra.mxu0 %v1193
    %1216 = vmatprep.subr.bf16.mxu0 0
    %1217 = vmatpush1.bf16.msra.mxu0 %v1194
    %1218 = vmatprep.subr.bf16.mxu0 0
    %1219 = vmatpush1.bf16.msra.mxu0 %v1195
    %1220 = vmatprep.subr.bf16.mxu0 0
    %1221 = vmatpush1.bf16.msra.mxu0 0
    %1222 = vmatprep.subr.bf16.mxu0 0
    %1223 = vmatpush1.bf16.msra.mxu0 0
    %1224 = vmatprep.subr.bf16.mxu0 0
    %1225 = vmatpush1.bf16.msra.mxu0 0
    %1226 = vmatprep.subr.bf16.mxu0 0
    %1227 = vmatpush1.bf16.msra.mxu0 0
    %1228 = vmatprep.subr.bf16.mxu0 0
    %1229 = vmatpush1.bf16.msra.mxu0 0
    %1230 = vmatprep.subr.bf16.mxu0 0
    %1231 = vmatpush1.bf16.msra.mxu0 0
    %1232 = vmatprep.subr.bf16.mxu0 0
    %1233 = vmatpush1.bf16.msra.mxu0 0
    %1234 = vmatprep.subr.bf16.mxu0 0
    %1235 = vmatpush1.bf16.msra.mxu0 0
    %1236 = vmatprep.mubr.bf16.mxu0 0
    %1237 = vmatmul.mubr.bf16.gmra.mrb[0].mxu0 %v1132
    %v1238 = vpop.f32.mrb[0].mxu0
    %v1239 = vadd.f32 %v1154, %v1238
    %v1240 = vpop.f32.mrb[0].mxu0
    %v1241 = vpop.f32.mrb[0].mxu0
    %v1242 = vpop.f32.mrb[0].mxu0
    %1243 = vdwg.mxu0
    %vm1244 = vcmask 64512
    %1245 = vst.msk [vmem:[%s13] sm:$0xff] %vm1244, %v1239
    // Predicated region
    $region62: #{neural_network_forward.1} parent=1 // pred_check
      _
    $region63: #{neural_network_forward.1} parent=1 // pred_check_branch
      %1247 = sbr.rel (0) target = $region65
    $region64: #{neural_network_forward.1} parent=1 // pred_region
      _
    $region65: #{neural_network_forward.1} parent=1 // pred_fallthru
      _
    // Predicated region
    $region66: #{neural_network_forward.1} parent=1 // pred_check
      _
    $region67: #{neural_network_forward.1} parent=1 // pred_check_branch
      %1249 = sbr.rel (0) target = $region69
    $region68: #{neural_network_forward.1} parent=1 // pred_region
      _
    $region69: #{neural_network_forward.1} parent=1 // pred_fallthru
      _
    %1250 = vsyncpa [#allocation3], 1
    %1251 = vsyncpa [#allocation5], 1

</llo_original>
